<compile_context>
chip_gen: v6e
topology: v6e:2x2x1
jax: 0.10.0
libtpu: 0.0.40
codegen_flags: <defaults>
</compile_context>

<pallas_src>
import math

import jax
import jax.numpy as jnp
from jax.experimental import pallas as pl
from jax.experimental.pallas import tpu as pltpu

LAYER_NORM_EPS = 1e-12


def classifier_kernel(x_ref, w1_ref, ln_ref, w2_ref, b2_ref, o_ref):
    # x_ref: [TB, in_dim], w1_ref: [in_dim, hid], ln_ref: [3, hid] = (b1, gamma, beta)
    # w2_ref: [hid, out_pad], b2_ref: [1, out_pad], o_ref: [TB, out_pad]
    p = ln_ref[...].astype(jnp.float32)
    b1 = p[0:1, :]
    gamma = p[1:2, :]
    beta = p[2:3, :]

    # Linear 1 on the MXU: native-dtype operands, f32 accumulation.
    h = jnp.dot(x_ref[...], w1_ref[...], preferred_element_type=jnp.float32)
    h = h + b1

    # Exact (erf-based) GeLU, identical to the PyTorch reference.
    h = h * 0.5 * (1.0 + jax.lax.erf(h * jnp.float32(1.0 / math.sqrt(2.0))))

    # BertLayerNorm: biased mean/var over the feature dim; rsqrt runs on the EUP slot.
    mean = jnp.mean(h, axis=-1, keepdims=True)
    centered = h - mean
    var = jnp.mean(centered * centered, axis=-1, keepdims=True)
    hn = centered * jax.lax.rsqrt(var + jnp.float32(LAYER_NORM_EPS))
    hn = hn * gamma + beta

    # Linear 2 on the MXU into the lane-padded (multiple-of-128) output slab.
    out = jnp.dot(hn.astype(w2_ref.dtype), w2_ref[...], preferred_element_type=jnp.float32)
    out = out + b2_ref[...].astype(jnp.float32)
    o_ref[...] = out.astype(o_ref.dtype)


def _round_up(n, m):
    return (n + m - 1) // m * m


def _sublane_pack(dtype):
    # Rows per packed sublane group: 8 for 4-byte, 16 for 2-byte, 32 for 1-byte dtypes.
    return {4: 8, 2: 16, 1: 32}.get(jnp.dtype(dtype).itemsize, 8)


def _num_tensorcores_per_chip():
    try:
        kind = jax.devices()[0].device_kind.lower()
        return 2 if "v7" in kind else 1
    except Exception:
        return 1


def _vmem_cap_bytes():
    try:
        kind = jax.devices()[0].device_kind.lower()
        return (64 << 20) if "v7" in kind else (128 << 20)
    except Exception:
        return 64 << 20


def _default_block_batch(batch, pack, n_cores):
    if batch >= 2048:
        return 1024                           # shrunk later if VMEM-tight
    if batch >= 512:
        return 512                            # ~85% of HBM roofline vs ~63% at 256
    if batch >= 2 * pack and n_cores >= 2:
        return _round_up((batch + 1) // 2, pack)  # >=2 grid steps only pays on 2-TC chips
    return _round_up(max(batch, 1), pack)


def _vmem_footprint(block_batch, in_dim, hid, out_pad, dtype):
    isz = jnp.dtype(dtype).itemsize
    x_tiles = 2 * block_batch * in_dim * isz          # double-buffered input tile
    o_tiles = 2 * block_batch * out_pad * isz         # double-buffered output tile
    weights = (in_dim * hid + hid * out_pad) * isz    # resident, single-buffered
    params = (8 * hid + 8 * out_pad) * isz            # (8,128)-padded small operands
    interm = block_batch * (3 * hid + out_pad) * 4    # f32 h / centered / hn + out
    return x_tiles + o_tiles + weights + params + interm


def _build_classifier_call(B, in_dim, hid, out_pad, dtype, block_batch,
                           single_buffer_weights, vmem_limit, cost):
    weight_mode = pl.Buffered(1) if single_buffer_weights else None

    def resident(shape):
        index_map = lambda i: (0,) * len(shape)
        if weight_mode is None:
            return pl.BlockSpec(shape, index_map)
        return pl.BlockSpec(shape, index_map, pipeline_mode=weight_mode)

    grid = (pl.cdiv(B, block_batch),)
    return pl.pallas_call(
        classifier_kernel,
        out_shape=jax.ShapeDtypeStruct((B, out_pad), dtype),
        grid=grid,
        in_specs=[
            pl.BlockSpec((block_batch, in_dim), lambda i: (i, 0)),  # x tile (pipelined)
            resident((in_dim, hid)),                                # W1 (resident)
            resident((3, hid)),                                     # b1 / gamma / beta
            resident((hid, out_pad)),                               # W2 (resident, lane-padded)
            resident((1, out_pad)),                                 # b2
        ],
        out_specs=pl.BlockSpec((block_batch, out_pad), lambda i: (i, 0)),
        compiler_params=pltpu.CompilerParams(
            dimension_semantics=("parallel",),
            vmem_limit_bytes=vmem_limit,
        ),
        cost_estimate=cost,
    )


def simple_classifier(x, w1, b1, gamma, beta, w2, b2, *, block_batch=None):
    B, in_dim = x.shape
    hid = w1.shape[1]
    out_dim = w2.shape[1]
    dtype = x.dtype

    pack = _sublane_pack(dtype)
    n_cores = _num_tensorcores_per_chip()
    budget = int(_vmem_cap_bytes() * 0.85)

    # Lane-dense output: pad the head to a multiple of 128 lanes; slice back afterwards.
    out_pad = _round_up(out_dim, 128)
    if out_pad != out_dim:
        w2 = jnp.pad(w2, ((0, 0), (0, out_pad - out_dim)))
        b2 = jnp.pad(b2, (0, out_pad - out_dim))

    if block_batch is None:
        block_batch = _default_block_batch(B, pack, n_cores)
    block_batch = _round_up(block_batch, pack)

    # Shrink the batch tile until the VMEM footprint fits the per-core budget.
    while (_vmem_footprint(block_batch, in_dim, hid, out_pad, dtype) > budget
           and block_batch > pack):
        block_batch = max(pack, _round_up(block_batch // 2, pack))
    # TODO(synk): add a K-tiled (grid over in_dim, f32 accumulator + pl.when) or bf16-weight
    # fallback for weights too large to stay resident in v7x's 64 MiB VMEM; shrinking the
    # batch tile cannot fix that case.

    footprint = _vmem_footprint(block_batch, in_dim, hid, out_pad, dtype)
    vmem_limit = min(budget, max(32 << 20, int(footprint * 1.25)))

    # Fold the three [hid] LayerNorm/bias params into one [3, hid] operand.
    ln_params = jnp.stack([b1, gamma, beta], axis=0)
    b2_2d = b2.reshape(1, out_pad)

    itemsize = jnp.dtype(dtype).itemsize
    cost = pl.CostEstimate(
        flops=2 * B * (in_dim * hid + hid * out_pad),
        transcendentals=B * hid,
        bytes_accessed=itemsize * (B * in_dim + in_dim * hid + hid * out_pad
                                   + 3 * hid + out_pad + B * out_pad),
    )

    args = (x, w1, ln_params, w2, b2_2d)
    try:
        out = _build_classifier_call(B, in_dim, hid, out_pad, dtype, block_batch,
                                     True, vmem_limit, cost)(*args)
    except Exception:
        # Fallback: let Pallas double-buffer the grid-invariant operands.
        out = _build_classifier_call(B, in_dim, hid, out_pad, dtype, block_batch,
                                     False, vmem_limit, cost)(*args)

    if out_pad != out_dim:
        out = out[:, :out_dim]
    return out


def xavier_uniform(key, fan_in, fan_out, dtype=jnp.float32):
    # Matches nn.init.xavier_uniform_ for a Linear weight of shape [out, in];
    # we sample directly in [in, out] layout (bound depends only on fan_in+fan_out).
    bound = math.sqrt(6.0 / (fan_in + fan_out))
    return jax.random.uniform(key, (fan_in, fan_out), dtype=dtype, minval=-bound, maxval=bound)


def reference_forward(x, w1, b1, gamma, beta, w2, b2):
    h = x @ w1 + b1
    h = h * 0.5 * (1.0 + jax.lax.erf(h / jnp.float32(math.sqrt(2.0))))
    mean = jnp.mean(h, axis=-1, keepdims=True)
    var = jnp.mean((h - mean) ** 2, axis=-1, keepdims=True)
    hn = (h - mean) / jnp.sqrt(var + LAYER_NORM_EPS)
    hn = hn * gamma + beta
    return hn @ w2 + b2


if __name__ == "__main__":
    # Small shapes consistent with the module's forward: [batch, in_dim].
    batch, in_dim, hid_dim, out_dim = 16, 32, 64, 8

    key = jax.random.PRNGKey(0)
    kx, kx2, kw1, kw2 = jax.random.split(key, 4)

    x = jax.random.normal(kx, (batch, in_dim), dtype=jnp.float32)

    # Deterministic init mirroring SimpleClassifier.init_weights:
    #   Linear: xavier_uniform weight, zero bias; BertLayerNorm: weight=1, bias=0
    w1 = xavier_uniform(kw1, in_dim, hid_dim)
    b1 = jnp.zeros((hid_dim,), jnp.float32)
    gamma = jnp.ones((hid_dim,), jnp.float32)
    beta = jnp.zeros((hid_dim,), jnp.float32)
    w2 = xavier_uniform(kw2, hid_dim, out_dim)
    b2 = jnp.zeros((out_dim,), jnp.float32)

    out = jax.block_until_ready(simple_classifier(x, w1, b1, gamma, beta, w2, b2))
    ref = reference_forward(x, w1, b1, gamma, beta, w2, b2)
    assert out.shape == (batch, out_dim)
    assert jnp.allclose(out, ref, atol=3e-5, rtol=3e-5)

    # Exercise the no-pad cdiv grid with a partial final batch block (20 rows, 8-row tiles).
    batch2 = 20
    x2 = jax.random.normal(kx2, (batch2, in_dim), dtype=jnp.float32)
    out2 = jax.block_until_ready(
        simple_classifier(x2, w1, b1, gamma, beta, w2, b2, block_batch=8))
    ref2 = reference_forward(x2, w1, b1, gamma, beta, w2, b2)
    assert out2.shape == (batch2, out_dim)
    assert jnp.allclose(out2, ref2, atol=3e-5, rtol=3e-5)

    print("KERNEL_OK")
</pallas_src>

<mosaic_0001>
module attributes {stable_mosaic.version = 11 : i64} {
  func.func @classifier_kernel(%arg0: i32, %arg1: memref<16x32xf32, #tpu.memory_space<vmem>>, %arg2: memref<32x64xf32, #tpu.memory_space<vmem>>, %arg3: memref<3x64xf32, #tpu.memory_space<vmem>>, %arg4: memref<64x128xf32, #tpu.memory_space<vmem>>, %arg5: memref<1x128xf32, #tpu.memory_space<vmem>>, %arg6: memref<16x128xf32, #tpu.memory_space<vmem>>) attributes {dimension_semantics = [#tpu.dimension_semantics<parallel>], iteration_bounds = array<i64: 1>, scalar_prefetch = 0 : i64, scratch_operands = 0 : i64, tpu.core_type = #tpu.core_type<tc>, window_params = [{transform_indices = @transform_0, window_bounds = array<i64: 16, 32>}, {pipeline_mode = #tpu.pipeline_mode<synchronous>, transform_indices = @transform_1, window_bounds = array<i64: 32, 64>}, {pipeline_mode = #tpu.pipeline_mode<synchronous>, transform_indices = @transform_2, window_bounds = array<i64: 3, 64>}, {pipeline_mode = #tpu.pipeline_mode<synchronous>, transform_indices = @transform_3, window_bounds = array<i64: 64, 128>}, {pipeline_mode = #tpu.pipeline_mode<synchronous>, transform_indices = @transform_4, window_bounds = array<i64: 1, 128>}, {transform_indices = @transform_5, window_bounds = array<i64: 16, 128>}]} {
    %c0 = arith.constant 0 : index
    %c0_0 = arith.constant 0 : index
    %0 = vector.load %arg3[%c0, %c0_0] : memref<3x64xf32, #tpu.memory_space<vmem>>, vector<3x64xf32>
    %1 = vector.extract_strided_slice %0 {offsets = [0, 0], sizes = [1, 64], strides = [1, 1]} : vector<3x64xf32> to vector<1x64xf32>
    %2 = vector.extract_strided_slice %0 {offsets = [1, 0], sizes = [1, 64], strides = [1, 1]} : vector<3x64xf32> to vector<1x64xf32>
    %3 = vector.extract_strided_slice %0 {offsets = [2, 0], sizes = [1, 64], strides = [1, 1]} : vector<3x64xf32> to vector<1x64xf32>
    %c0_1 = arith.constant 0 : index
    %c0_2 = arith.constant 0 : index
    %4 = vector.load %arg1[%c0_1, %c0_2] : memref<16x32xf32, #tpu.memory_space<vmem>>, vector<16x32xf32>
    %c0_3 = arith.constant 0 : index
    %c0_4 = arith.constant 0 : index
    %5 = vector.load %arg2[%c0_3, %c0_4] : memref<32x64xf32, #tpu.memory_space<vmem>>, vector<32x64xf32>
    %cst = arith.constant dense<0.000000e+00> : vector<16x64xf32>
    %6 = tpu.matmul %4, %5, %cst {dimension_numbers = #tpu.dot_dimension_numbers<[1], [0], [0], [1], [0, 0, 1, 1], [], []>} : vector<16x32xf32>, vector<32x64xf32>, vector<16x64xf32> -> vector<16x64xf32>
    %7 = vector.broadcast %1 : vector<1x64xf32> to vector<16x64xf32>
    %8 = arith.addf %6, %7 : vector<16x64xf32>
    %cst_5 = arith.constant 5.000000e-01 : f32
    %9 = vector.broadcast %cst_5 : f32 to vector<16x64xf32>
    %10 = arith.mulf %8, %9 : vector<16x64xf32>
    %cst_6 = arith.constant 0.707106769 : f32
    %11 = vector.broadcast %cst_6 : f32 to vector<16x64xf32>
    %12 = arith.mulf %8, %11 : vector<16x64xf32>
    %13 = math.erf %12 : vector<16x64xf32>
    %cst_7 = arith.constant 1.000000e+00 : f32
    %14 = vector.broadcast %cst_7 : f32 to vector<16x64xf32>
    %15 = arith.addf %14, %13 : vector<16x64xf32>
    %16 = arith.mulf %10, %15 : vector<16x64xf32>
    %cst_8 = arith.constant dense<0.000000e+00> : vector<16xf32>
    %17 = vector.multi_reduction <add>, %16, %cst_8 [1] : vector<16x64xf32> to vector<16xf32>
    %18 = vector.shape_cast %17 : vector<16xf32> to vector<16x1xf32>
    %cst_9 = arith.constant 6.400000e+01 : f32
    %19 = vector.broadcast %cst_9 : f32 to vector<16x1xf32>
    %20 = arith.divf %18, %19 : vector<16x1xf32>
    %21 = vector.broadcast %20 : vector<16x1xf32> to vector<16x64xf32>
    %22 = arith.subf %16, %21 : vector<16x64xf32>
    %23 = arith.mulf %22, %22 : vector<16x64xf32>
    %cst_10 = arith.constant dense<0.000000e+00> : vector<16xf32>
    %24 = vector.multi_reduction <add>, %23, %cst_10 [1] : vector<16x64xf32> to vector<16xf32>
    %25 = vector.shape_cast %24 : vector<16xf32> to vector<16x1xf32>
    %cst_11 = arith.constant 6.400000e+01 : f32
    %26 = vector.broadcast %cst_11 : f32 to vector<16x1xf32>
    %27 = arith.divf %25, %26 : vector<16x1xf32>
    %cst_12 = arith.constant 9.99999996E-13 : f32
    %28 = vector.broadcast %cst_12 : f32 to vector<16x1xf32>
    %29 = arith.addf %27, %28 : vector<16x1xf32>
    %30 = math.rsqrt %29 : vector<16x1xf32>
    %31 = vector.broadcast %30 : vector<16x1xf32> to vector<16x64xf32>
    %32 = arith.mulf %22, %31 : vector<16x64xf32>
    %33 = vector.broadcast %2 : vector<1x64xf32> to vector<16x64xf32>
    %34 = arith.mulf %32, %33 : vector<16x64xf32>
    %35 = vector.broadcast %3 : vector<1x64xf32> to vector<16x64xf32>
    %36 = arith.addf %34, %35 : vector<16x64xf32>
    %c0_13 = arith.constant 0 : index
    %c0_14 = arith.constant 0 : index
    %37 = vector.load %arg4[%c0_13, %c0_14] : memref<64x128xf32, #tpu.memory_space<vmem>>, vector<64x128xf32>
    %cst_15 = arith.constant dense<0.000000e+00> : vector<16x128xf32>
    %38 = tpu.matmul %36, %37, %cst_15 {dimension_numbers = #tpu.dot_dimension_numbers<[1], [0], [0], [1], [0, 0, 1, 1], [], []>} : vector<16x64xf32>, vector<64x128xf32>, vector<16x128xf32> -> vector<16x128xf32>
    %c0_16 = arith.constant 0 : index
    %c0_17 = arith.constant 0 : index
    %39 = vector.load %arg5[%c0_16, %c0_17] : memref<1x128xf32, #tpu.memory_space<vmem>>, vector<1x128xf32>
    %40 = vector.broadcast %39 : vector<1x128xf32> to vector<16x128xf32>
    %41 = arith.addf %38, %40 : vector<16x128xf32>
    %c0_18 = arith.constant 0 : index
    %c0_19 = arith.constant 0 : index
    %42 = vector.load %arg6[%c0_18, %c0_19] : memref<16x128xf32, #tpu.memory_space<vmem>>, vector<16x128xf32>
    tpu.vector_store %arg6[%c0_18, %c0_19], %41 {strides = array<i32>} : memref<16x128xf32, #tpu.memory_space<vmem>>, vector<16x128xf32>,
    return
  }
  func.func @transform_0(%arg0: i32) -> (i32, i32) {
    %c0_i32 = arith.constant 0 : i32
    %c0_i32_0 = arith.constant 0 : i32
    return %arg0, %c0_i32 : i32, i32
  }
  func.func @transform_1(%arg0: i32) -> (i32, i32) {
    %c0_i32 = arith.constant 0 : i32
    %c0_i32_0 = arith.constant 0 : i32
    %c0_i32_1 = arith.constant 0 : i32
    return %c0_i32, %c0_i32_0 : i32, i32
  }
  func.func @transform_2(%arg0: i32) -> (i32, i32) {
    %c0_i32 = arith.constant 0 : i32
    %c0_i32_0 = arith.constant 0 : i32
    %c0_i32_1 = arith.constant 0 : i32
    return %c0_i32, %c0_i32_0 : i32, i32
  }
  func.func @transform_3(%arg0: i32) -> (i32, i32) {
    %c0_i32 = arith.constant 0 : i32
    %c0_i32_0 = arith.constant 0 : i32
    %c0_i32_1 = arith.constant 0 : i32
    return %c0_i32, %c0_i32_0 : i32, i32
  }
  func.func @transform_4(%arg0: i32) -> (i32, i32) {
    %c0_i32 = arith.constant 0 : i32
    %c0_i32_0 = arith.constant 0 : i32
    %c0_i32_1 = arith.constant 0 : i32
    return %c0_i32, %c0_i32_0 : i32, i32
  }
  func.func @transform_5(%arg0: i32) -> (i32, i32) {
    %c0_i32 = arith.constant 0 : i32
    %c0_i32_0 = arith.constant 0 : i32
    return %arg0, %c0_i32 : i32, i32
  }
}

module attributes {stable_mosaic.version = 11 : i64} {
  func.func @classifier_kernel(%arg0: i32, %arg1: memref<16x32xf32, #tpu.memory_space<vmem>>, %arg2: memref<32x64xf32, #tpu.memory_space<vmem>>, %arg3: memref<3x64xf32, #tpu.memory_space<vmem>>, %arg4: memref<64x128xf32, #tpu.memory_space<vmem>>, %arg5: memref<1x128xf32, #tpu.memory_space<vmem>>, %arg6: memref<16x128xf32, #tpu.memory_space<vmem>>) attributes {dimension_semantics = [#tpu.dimension_semantics<parallel>], iteration_bounds = array<i64: 1>, scalar_prefetch = 0 : i64, scratch_operands = 0 : i64, tpu.core_type = #tpu.core_type<tc>, window_params = [{transform_indices = @transform_0, window_bounds = array<i64: 16, 32>}, {pipeline_mode = #tpu.pipeline_mode<synchronous>, transform_indices = @transform_1, window_bounds = array<i64: 32, 64>}, {pipeline_mode = #tpu.pipeline_mode<synchronous>, transform_indices = @transform_2, window_bounds = array<i64: 3, 64>}, {pipeline_mode = #tpu.pipeline_mode<synchronous>, transform_indices = @transform_3, window_bounds = array<i64: 64, 128>}, {pipeline_mode = #tpu.pipeline_mode<synchronous>, transform_indices = @transform_4, window_bounds = array<i64: 1, 128>}, {transform_indices = @transform_5, window_bounds = array<i64: 16, 128>}]} {
    %c0 = arith.constant 0 : index
    %c0_0 = arith.constant 0 : index
    %0 = vector.load %arg3[%c0, %c0_0] : memref<3x64xf32, #tpu.memory_space<vmem>>, vector<3x64xf32>
    %1 = vector.extract_strided_slice %0 {offsets = [0, 0], sizes = [1, 64], strides = [1, 1]} : vector<3x64xf32> to vector<1x64xf32>
    %2 = vector.extract_strided_slice %0 {offsets = [1, 0], sizes = [1, 64], strides = [1, 1]} : vector<3x64xf32> to vector<1x64xf32>
    %3 = vector.extract_strided_slice %0 {offsets = [2, 0], sizes = [1, 64], strides = [1, 1]} : vector<3x64xf32> to vector<1x64xf32>
    %c0_1 = arith.constant 0 : index
    %c0_2 = arith.constant 0 : index
    %4 = vector.load %arg1[%c0_1, %c0_2] : memref<16x32xf32, #tpu.memory_space<vmem>>, vector<16x32xf32>
    %c0_3 = arith.constant 0 : index
    %c0_4 = arith.constant 0 : index
    %5 = vector.load %arg2[%c0_3, %c0_4] : memref<32x64xf32, #tpu.memory_space<vmem>>, vector<32x64xf32>
    %cst = arith.constant dense<0.000000e+00> : vector<16x64xf32>
    %6 = tpu.matmul %4, %5, %cst {dimension_numbers = #tpu.dot_dimension_numbers<[1], [0], [0], [1], [0, 0, 1, 1], [], []>} : vector<16x32xf32>, vector<32x64xf32>, vector<16x64xf32> -> vector<16x64xf32>
    %7 = vector.broadcast %1 : vector<1x64xf32> to vector<16x64xf32>
    %8 = arith.addf %6, %7 : vector<16x64xf32>
    %cst_5 = arith.constant 5.000000e-01 : f32
    %9 = vector.broadcast %cst_5 : f32 to vector<16x64xf32>
    %10 = arith.mulf %8, %9 : vector<16x64xf32>
    %cst_6 = arith.constant 0.707106769 : f32
    %11 = vector.broadcast %cst_6 : f32 to vector<16x64xf32>
    %12 = arith.mulf %8, %11 : vector<16x64xf32>
    %13 = math.erf %12 : vector<16x64xf32>
    %cst_7 = arith.constant 1.000000e+00 : f32
    %14 = vector.broadcast %cst_7 : f32 to vector<16x64xf32>
    %15 = arith.addf %14, %13 : vector<16x64xf32>
    %16 = arith.mulf %10, %15 : vector<16x64xf32>
    %cst_8 = arith.constant dense<0.000000e+00> : vector<16xf32>
    %17 = vector.multi_reduction <add>, %16, %cst_8 [1] : vector<16x64xf32> to vector<16xf32>
    %18 = vector.shape_cast %17 : vector<16xf32> to vector<16x1xf32>
    %cst_9 = arith.constant 6.400000e+01 : f32
    %19 = vector.broadcast %cst_9 : f32 to vector<16x1xf32>
    %20 = arith.divf %18, %19 : vector<16x1xf32>
    %21 = vector.broadcast %20 : vector<16x1xf32> to vector<16x64xf32>
    %22 = arith.subf %16, %21 : vector<16x64xf32>
    %23 = arith.mulf %22, %22 : vector<16x64xf32>
    %cst_10 = arith.constant dense<0.000000e+00> : vector<16xf32>
    %24 = vector.multi_reduction <add>, %23, %cst_10 [1] : vector<16x64xf32> to vector<16xf32>
    %25 = vector.shape_cast %24 : vector<16xf32> to vector<16x1xf32>
    %cst_11 = arith.constant 6.400000e+01 : f32
    %26 = vector.broadcast %cst_11 : f32 to vector<16x1xf32>
    %27 = arith.divf %25, %26 : vector<16x1xf32>
    %cst_12 = arith.constant 9.99999996E-13 : f32
    %28 = vector.broadcast %cst_12 : f32 to vector<16x1xf32>
    %29 = arith.addf %27, %28 : vector<16x1xf32>
    %30 = math.rsqrt %29 : vector<16x1xf32>
    %31 = vector.broadcast %30 : vector<16x1xf32> to vector<16x64xf32>
    %32 = arith.mulf %22, %31 : vector<16x64xf32>
    %33 = vector.broadcast %2 : vector<1x64xf32> to vector<16x64xf32>
    %34 = arith.mulf %32, %33 : vector<16x64xf32>
    %35 = vector.broadcast %3 : vector<1x64xf32> to vector<16x64xf32>
    %36 = arith.addf %34, %35 : vector<16x64xf32>
    %c0_13 = arith.constant 0 : index
    %c0_14 = arith.constant 0 : index
    %37 = vector.load %arg4[%c0_13, %c0_14] : memref<64x128xf32, #tpu.memory_space<vmem>>, vector<64x128xf32>
    %cst_15 = arith.constant dense<0.000000e+00> : vector<16x128xf32>
    %38 = tpu.matmul %36, %37, %cst_15 {dimension_numbers = #tpu.dot_dimension_numbers<[1], [0], [0], [1], [0, 0, 1, 1], [], []>} : vector<16x64xf32>, vector<64x128xf32>, vector<16x128xf32> -> vector<16x128xf32>
    %c0_16 = arith.constant 0 : index
    %c0_17 = arith.constant 0 : index
    %39 = vector.load %arg5[%c0_16, %c0_17] : memref<1x128xf32, #tpu.memory_space<vmem>>, vector<1x128xf32>
    %40 = vector.broadcast %39 : vector<1x128xf32> to vector<16x128xf32>
    %41 = arith.addf %38, %40 : vector<16x128xf32>
    %c0_18 = arith.constant 0 : index
    %c0_19 = arith.constant 0 : index
    %42 = vector.load %arg6[%c0_18, %c0_19] : memref<16x128xf32, #tpu.memory_space<vmem>>, vector<16x128xf32>
    tpu.vector_store %arg6[%c0_18, %c0_19], %41 {strides = array<i32>} : memref<16x128xf32, #tpu.memory_space<vmem>>, vector<16x128xf32>,
    return
  }
  func.func @transform_0(%arg0: i32) -> (i32, i32) {
    %c0_i32 = arith.constant 0 : i32
    %c0_i32_0 = arith.constant 0 : i32
    return %arg0, %c0_i32 : i32, i32
  }
  func.func @transform_1(%arg0: i32) -> (i32, i32) {
    %c0_i32 = arith.constant 0 : i32
    %c0_i32_0 = arith.constant 0 : i32
    %c0_i32_1 = arith.constant 0 : i32
    return %c0_i32, %c0_i32_0 : i32, i32
  }
  func.func @transform_2(%arg0: i32) -> (i32, i32) {
    %c0_i32 = arith.constant 0 : i32
    %c0_i32_0 = arith.constant 0 : i32
    %c0_i32_1 = arith.constant 0 : i32
    return %c0_i32, %c0_i32_0 : i32, i32
  }
  func.func @transform_3(%arg0: i32) -> (i32, i32) {
    %c0_i32 = arith.constant 0 : i32
    %c0_i32_0 = arith.constant 0 : i32
    %c0_i32_1 = arith.constant 0 : i32
    return %c0_i32, %c0_i32_0 : i32, i32
  }
  func.func @transform_4(%arg0: i32) -> (i32, i32) {
    %c0_i32 = arith.constant 0 : i32
    %c0_i32_0 = arith.constant 0 : i32
    %c0_i32_1 = arith.constant 0 : i32
    return %c0_i32, %c0_i32_0 : i32, i32
  }
  func.func @transform_5(%arg0: i32) -> (i32, i32) {
    %c0_i32 = arith.constant 0 : i32
    %c0_i32_0 = arith.constant 0 : i32
    return %arg0, %c0_i32 : i32, i32
  }
}

</mosaic_0001>

<llo_original>
// kernel: tpu_custom_call.1
$region0: #{tpu_custom_call.1}
  #allocation0 [shape = 'u32[]', space=smem, size = 0x4, offset = 0x4, fixed_abs, tag = 'smem constant byte address 0x4 - core index']
  #allocation1 [shape = 'u32[144,128]{1,0:T(1,128)}', space=vmem, size = 0x12000, scoped, tag = 'internal scratch']
  %s0 = inlined_call_operand.hbm [shape: f32[16,32], index: 0, kind: input, shape index: {}]
  %s1 = inlined_call_operand.hbm [shape: f32[32,64], index: 1, kind: input, shape index: {}]
  %s2 = inlined_call_operand.hbm [shape: f32[3,64], index: 2, kind: input, shape index: {}]
  %s3 = inlined_call_operand.hbm [shape: f32[64,128], index: 3, kind: input, shape index: {}]
  %s4 = inlined_call_operand.vmem [shape: f32[1,128], index: 4, kind: input, shape index: {}]
  %s5 = inlined_call_operand.hbm [shape: f32[16,128], index: 5, kind: output, shape index: {}]
  %s6 = sld [smem:[#allocation0]]
  $region46: #{tpu_custom_call.1} parent=0
    _
  %s8 = ssub.s32 1, %s6
  %s9 = scalar_select 0, %s8, %s6
  $region1: #{tpu_custom_call.1} parent=0
    #allocation2 [shape = 'u8[8192]{0}', space=vmem, size = 0x2000, scoped, tag = 'input window, operand 0, single buffered']
    #allocation3 [shape = 's32[1]{0}', space=sflag, size = 0x4, scoped, tag = 'scoped memory for tpu_custom_call.1']
    #allocation4 [shape = 's32[1]{0}', space=sflag, size = 0x4, scoped, tag = 'scoped memory for tpu_custom_call.1']
    #allocation5 [shape = 'u8[16384]{0}', space=vmem, size = 0x4000, scoped, tag = 'input window, operand 1, single buffered']
    #allocation6 [shape = 's32[1]{0}', space=sflag, size = 0x4, scoped, tag = 'scoped memory for tpu_custom_call.1']
    #allocation7 [shape = 'u8[2048]{0}', space=vmem, size = 0x800, scoped, tag = 'input window, operand 2, single buffered']
    #allocation8 [shape = 'u8[32768]{0}', space=vmem, size = 0x8000, scoped, tag = 'input window, operand 3, single buffered']
    #allocation9 [shape = 's32[1]{0}', space=sflag, size = 0x4, scoped, tag = 'scoped memory for tpu_custom_call.1']
    #allocation10 [shape = 'u8[8192]{0}', space=vmem, size = 0x2000, scoped, tag = 'output window, operand 0, single buffered']
    %10 = vsyncpa [#allocation3], 0
    %11 = vsyncpa [#allocation6], 0
    %12 = vsyncpa [#allocation9], 0
    %13 = vsyncpa [#allocation4], 0
    // Predicated region
    $region2: #{tpu_custom_call.1} parent=1 // pred_check
      _
    $region3: #{tpu_custom_call.1} parent=1 // pred_check_branch
      %15 = sbr.rel (0) target = $region5
    $region4: #{tpu_custom_call.1} parent=1 // pred_region
      %s17 = ssub.s32 256, 256
      %18 = vsyncadd [#allocation3], %s17
      %s19 = sshll.u32 [#allocation2], 4
      %s20 = int_to_ptr.vmem [resolvable:$true] %s19
      %25 = dma.hbm_to_vmem [thread:$0]  %s0, 256, %s20, [#allocation3], 128, 128, 8
    $region5: #{tpu_custom_call.1} parent=1 // pred_fallthru
      _
    // Predicated region
    $region6: #{tpu_custom_call.1} parent=1 // pred_check
      _
    $region7: #{tpu_custom_call.1} parent=1 // pred_check_branch
      %27 = sbr.rel (0) target = $region9
    $region8: #{tpu_custom_call.1} parent=1 // pred_region
      %s29 = ssub.s32 512, 512
      %30 = vsyncadd [#allocation6], %s29
      %s31 = sshll.u32 [#allocation5], 4
      %s32 = int_to_ptr.vmem [resolvable:$true] %s31
      %37 = dma.hbm_to_vmem [thread:$0]  %s1, 512, %s32, [#allocation6], 128, 128, 8
    $region9: #{tpu_custom_call.1} parent=1 // pred_fallthru
      _
    // Predicated region
    $region10: #{tpu_custom_call.1} parent=1 // pred_check
      _
    $region11: #{tpu_custom_call.1} parent=1 // pred_check_branch
      %39 = sbr.rel (0) target = $region13
    $region12: #{tpu_custom_call.1} parent=1 // pred_region
      %s41 = ssub.s32 64, 64
      %42 = vsyncadd [#allocation6], %s41
      %s44 = sshll.u32 [#allocation7], 4
      %s45 = int_to_ptr.vmem [resolvable:$true] %s44
      %47 = dma.hbm_to_vmem [thread:$0]  %s2, 64, %s45, [#allocation6]
    $region13: #{tpu_custom_call.1} parent=1 // pred_fallthru
      _
    // Predicated region
    $region14: #{tpu_custom_call.1} parent=1 // pred_check
      _
    $region15: #{tpu_custom_call.1} parent=1 // pred_check_branch
      %49 = sbr.rel (0) target = $region17
    $region16: #{tpu_custom_call.1} parent=1 // pred_region
      %s51 = ssub.s32 1024, 1024
      %52 = vsyncadd [#allocation9], %s51
      %s53 = sshll.u32 [#allocation8], 4
      %s54 = int_to_ptr.vmem [resolvable:$true] %s53
      %59 = dma.hbm_to_vmem [thread:$0]  %s3, 1024, %s54, [#allocation9], 128, 128, 8
    $region17: #{tpu_custom_call.1} parent=1 // pred_fallthru
      _
    // Predicated region
    $region18: #{tpu_custom_call.1} parent=1 // pred_check
      _
    $region19: #{tpu_custom_call.1} parent=1 // pred_check_branch
      %61 = sbr.rel (0) target = $region21
    $region20: #{tpu_custom_call.1} parent=1 // pred_region
      _
    $region21: #{tpu_custom_call.1} parent=1 // pred_fallthru
      _
    // Predicated region
    $region22: #{tpu_custom_call.1} parent=1 // pred_check
      _
    $region23: #{tpu_custom_call.1} parent=1 // pred_check_branch
      %63 = sbr.rel (0) target = $region25
    $region24: #{tpu_custom_call.1} parent=1 // pred_region
      %64 = dma.done [#allocation3], 256
    $region25: #{tpu_custom_call.1} parent=1 // pred_fallthru
      _
    // Predicated region
    $region26: #{tpu_custom_call.1} parent=1 // pred_check
      _
    $region27: #{tpu_custom_call.1} parent=1 // pred_check_branch
      %66 = sbr.rel (0) target = $region29
    $region28: #{tpu_custom_call.1} parent=1 // pred_region
      %67 = dma.done [#allocation6], 512
    $region29: #{tpu_custom_call.1} parent=1 // pred_fallthru
      _
    // Predicated region
    $region30: #{tpu_custom_call.1} parent=1 // pred_check
      _
    $region31: #{tpu_custom_call.1} parent=1 // pred_check_branch
      %69 = sbr.rel (0) target = $region33
    $region32: #{tpu_custom_call.1} parent=1 // pred_region
      %70 = dma.done [#allocation6], 64
    $region33: #{tpu_custom_call.1} parent=1 // pred_fallthru
      _
    // Predicated region
    $region34: #{tpu_custom_call.1} parent=1 // pred_check
      _
    $region35: #{tpu_custom_call.1} parent=1 // pred_check_branch
      %72 = sbr.rel (0) target = $region37
    $region36: #{tpu_custom_call.1} parent=1 // pred_region
      %73 = dma.done [#allocation9], 1024
    $region37: #{tpu_custom_call.1} parent=1 // pred_fallthru
      _
    %v74 = vld [vmem:[#allocation7] sm:$0x7]
    %v75 = vld [vmem:[#allocation2] sm:$0xff]
    %v76 = vld [vmem:[#allocation2 + $0x8] sm:$0xff]
    %v77 = vld [vmem:[#allocation5] sm:$0xff]
    %v78 = vld [vmem:[#allocation5 + $0x8] sm:$0xff]
    %v79 = vld [vmem:[#allocation5 + $0x10] sm:$0xff]
    %v80 = vld [vmem:[#allocation5 + $0x18] sm:$0xff]
    %v81 = vlaneseq
    %v82 = vshrl.u32 %v81, 7
    %v83 = vsub.s32 0, %v82
    %v84 = vrot.slane %v74, %v83
    %vm85 = vcmask 261120
    %v87 = vsel %vm85, %v75, 0
    %v90 = vsel %vm85, %v76, 0
    %92 = vmatprep.subr.mxu0 0.0
    %93 = vmatpush1.msra.mxu0 0.0
    %94 = vmatprep.subr.mxu0 0.0
    %95 = vmatpush1.msra.mxu0 0.0
    %96 = vmatprep.subr.mxu0 0.0
    %97 = vmatpush1.msra.mxu0 0.0
    %98 = vmatprep.subr.mxu0 0.0
    %99 = vmatpush1.msra.mxu0 0.0
    %100 = vmatprep.subr.mxu0 0.0
    %101 = vmatpush1.msra.mxu0 0.0
    %102 = vmatprep.subr.mxu0 0.0
    %103 = vmatpush1.msra.mxu0 0.0
    %104 = vmatprep.subr.mxu0 0.0
    %105 = vmatpush1.msra.mxu0 0.0
    %106 = vmatprep.subr.mxu0 0.0
    %107 = vmatpush1.msra.mxu0 0.0
    %108 = vmatprep.subr.mxu0 0.0
    %109 = vmatpush1.msra.mxu0 0.0
    %110 = vmatprep.subr.mxu0 0.0
    %111 = vmatpush1.msra.mxu0 0.0
    %112 = vmatprep.subr.mxu0 0.0
    %113 = vmatpush1.msra.mxu0 0.0
    %114 = vmatprep.subr.mxu0 0.0
    %115 = vmatpush1.msra.mxu0 0.0
    %116 = vmatprep.subr.mxu0 0.0
    %117 = vmatpush1.msra.mxu0 %v80
    %118 = vmatprep.subr.mxu0 0.0
    %119 = vmatpush1.msra.mxu0 %v79
    %120 = vmatprep.subr.mxu0 0.0
    %121 = vmatpush1.msra.mxu0 %v78
    %122 = vmatprep.subr.mxu0 0.0
    %123 = vmatpush1.msra.mxu0 %v77
    %124 = vmatprep.subr.mxu0 0.0
    %125 = vmatpush2.msra.mxu0 0.0
    %126 = vmatprep.subr.mxu0 0.0
    %127 = vmatpush2.msra.mxu0 0.0
    %128 = vmatprep.subr.mxu0 0.0
    %129 = vmatpush2.msra.mxu0 0.0
    %130 = vmatprep.subr.mxu0 0.0
    %131 = vmatpush2.msra.mxu0 0.0
    %132 = vmatprep.subr.mxu0 0.0
    %133 = vmatpush2.msra.mxu0 0.0
    %134 = vmatprep.subr.mxu0 0.0
    %135 = vmatpush2.msra.mxu0 0.0
    %136 = vmatprep.subr.mxu0 0.0
    %137 = vmatpush2.msra.mxu0 0.0
    %138 = vmatprep.subr.mxu0 0.0
    %139 = vmatpush2.msra.mxu0 0.0
    %140 = vmatprep.subr.mxu0 0.0
    %141 = vmatpush2.msra.mxu0 0.0
    %142 = vmatprep.subr.mxu0 0.0
    %143 = vmatpush2.msra.mxu0 0.0
    %144 = vmatprep.subr.mxu0 0.0
    %145 = vmatpush2.msra.mxu0 0.0
    %146 = vmatprep.subr.mxu0 0.0
    %147 = vmatpush2.msra.mxu0 0.0
    %148 = vmatprep.subr.mxu0 0.0
    %149 = vmatpush2.msra.mxu0 0.0
    %150 = vmatprep.subr.mxu0 0.0
    %151 = vmatpush2.msra.mxu0 0.0
    %152 = vmatprep.subr.mxu0 0.0
    %153 = vmatpush2.msra.mxu0 0.0
    %154 = vmatprep.subr.mxu0 0.0
    %155 = vmatpush2.msra.mxu0 0.0
    %156 = vmatprep.mubr.f32.mxu0 0.0
    %157 = vmatmul.mubr.f32.gmra.mxu0 %v87
    %v158 = vpop.f32.mrf.mxu0
    %v159 = vadd.f32 %v84, %v158
    %v160 = vpop.f32.mrf.mxu0
    %161 = vmatprep.mubr.f32.mxu0 0.0
    %162 = vmatmul.mubr.f32.gmra.mxu0 %v90
    %v163 = vpop.f32.mrf.mxu0
    %v164 = vadd.f32 %v84, %v163
    %v165 = vpop.f32.mrf.mxu0
    %166 = vdwg.mxu0
    %v167 = vmul.f32 %v159, 0.5
    %v168 = vmul.f32 %v164, 0.5
    %v169 = vmul.f32 %v159, 0.70710677
    %v170 = vmul.f32 %v164, 0.70710677
    %v171 = verf.f32.pop %v169
    %v172 = verf.f32.pop %v170
    %v173 = vadd.f32 %v171, 1.0
    %v174 = vadd.f32 %v172, 1.0
    %v175 = vmul.f32 %v167, %v173
    %v176 = vmul.f32 %v168, %v174
    %vm177 = vcmask 523264
    %v178 = vsel %vm177, %v175, 0.0
    %179 = vadd.xlane.f32.xlu0 %v178
    %v180 = vpop.xlane.xlu0 %179
    %v181 = vsel %vm177, %v176, 0.0
    %182 = vadd.xlane.f32.xlu0 %v181
    %v183 = vpop.xlane.xlu0 %182
    %v184 = vrcp.pop 64.0
    %v185 = vmul.f32 %v180, %v184
    %v186 = vmul.f32 %v183, %v184
    %v187 = vsub.f32 %v175, %v185
    %v188 = vsub.f32 %v176, %v186
    %v189 = vmul.f32 %v187, %v187
    %v190 = vmul.f32 %v188, %v188
    %v191 = vsel %vm177, %v189, 0.0
    %192 = vadd.xlane.f32.xlu0 %v191
    %v193 = vpop.xlane.xlu0 %192
    %v194 = vsel %vm177, %v190, 0.0
    %195 = vadd.xlane.f32.xlu0 %v194
    %v196 = vpop.xlane.xlu0 %195
    %v197 = vmul.f32 %v193, %v184
    %v198 = vmul.f32 %v196, %v184
    %v199 = vadd.f32 %v197, 1e-12
    %v200 = vadd.f32 %v198, 1e-12
    %v201 = vrsqrt.pop %v199
    %v202 = vrsqrt.pop %v200
    %v203 = vmul.f32 %v187, %v201
    %v204 = vmul.f32 %v188, %v202
    %v205 = vlaneseq
    %v206 = vshrl.u32 %v205, 7
    %v207 = vsub.s32 1, %v206
    %v208 = vrot.slane %v74, %v207
    %v209 = vmul.f32 %v203, %v208
    %v210 = vmul.f32 %v204, %v208
    %v211 = vlaneseq
    %v212 = vshrl.u32 %v211, 7
    %v213 = vsub.s32 2, %v212
    %v214 = vrot.slane %v74, %v213
    %v215 = vadd.f32 %v209, %v214
    %v216 = vadd.f32 %v210, %v214
    %v217 = vld [vmem:[#allocation8] sm:$0xff]
    %v218 = vld [vmem:[#allocation8 + $0x8] sm:$0xff]
    %v219 = vld [vmem:[#allocation8 + $0x10] sm:$0xff]
    %v220 = vld [vmem:[#allocation8 + $0x18] sm:$0xff]
    %v221 = vld [vmem:[#allocation8 + $0x20] sm:$0xff]
    %v222 = vld [vmem:[#allocation8 + $0x28] sm:$0xff]
    %v223 = vld [vmem:[#allocation8 + $0x30] sm:$0xff]
    %v224 = vld [vmem:[#allocation8 + $0x38] sm:$0xff]
    %v225 = vld [vmem:[%s4] sm:$0x1]
    %v227 = vlaneseq
    %v228 = vshrl.u32 %v227, 7
    %v229 = vsub.s32 0, %v228
    %v230 = vrot.slane %v225, %v229
    %v233 = vsel %vm177, %v215, 0
    %v236 = vsel %vm177, %v216, 0
    %238 = vmatprep.subr.mxu0 0.0
    %239 = vmatpush1.msra.mxu0 0.0
    %240 = vmatprep.subr.mxu0 0.0
    %241 = vmatpush1.msra.mxu0 0.0
    %242 = vmatprep.subr.mxu0 0.0
    %243 = vmatpush1.msra.mxu0 0.0
    %244 = vmatprep.subr.mxu0 0.0
    %245 = vmatpush1.msra.mxu0 0.0
    %246 = vmatprep.subr.mxu0 0.0
    %247 = vmatpush1.msra.mxu0 0.0
    %248 = vmatprep.subr.mxu0 0.0
    %249 = vmatpush1.msra.mxu0 0.0
    %250 = vmatprep.subr.mxu0 0.0
    %251 = vmatpush1.msra.mxu0 0.0
    %252 = vmatprep.subr.mxu0 0.0
    %253 = vmatpush1.msra.mxu0 0.0
    %254 = vmatprep.subr.mxu0 0.0
    %255 = vmatpush1.msra.mxu0 %v224
    %256 = vmatprep.subr.mxu0 0.0
    %257 = vmatpush1.msra.mxu0 %v223
    %258 = vmatprep.subr.mxu0 0.0
    %259 = vmatpush1.msra.mxu0 %v222
    %260 = vmatprep.subr.mxu0 0.0
    %261 = vmatpush1.msra.mxu0 %v221
    %262 = vmatprep.subr.mxu0 0.0
    %263 = vmatpush1.msra.mxu0 %v220
    %264 = vmatprep.subr.mxu0 0.0
    %265 = vmatpush1.msra.mxu0 %v219
    %266 = vmatprep.subr.mxu0 0.0
    %267 = vmatpush1.msra.mxu0 %v218
    %268 = vmatprep.subr.mxu0 0.0
    %269 = vmatpush1.msra.mxu0 %v217
    %270 = vmatprep.subr.mxu0 0.0
    %271 = vmatpush2.msra.mxu0 0.0
    %272 = vmatprep.subr.mxu0 0.0
    %273 = vmatpush2.msra.mxu0 0.0
    %274 = vmatprep.subr.mxu0 0.0
    %275 = vmatpush2.msra.mxu0 0.0
    %276 = vmatprep.subr.mxu0 0.0
    %277 = vmatpush2.msra.mxu0 0.0
    %278 = vmatprep.subr.mxu0 0.0
    %279 = vmatpush2.msra.mxu0 0.0
    %280 = vmatprep.subr.mxu0 0.0
    %281 = vmatpush2.msra.mxu0 0.0
    %282 = vmatprep.subr.mxu0 0.0
    %283 = vmatpush2.msra.mxu0 0.0
    %284 = vmatprep.subr.mxu0 0.0
    %285 = vmatpush2.msra.mxu0 0.0
    %286 = vmatprep.subr.mxu0 0.0
    %287 = vmatpush2.msra.mxu0 0.0
    %288 = vmatprep.subr.mxu0 0.0
    %289 = vmatpush2.msra.mxu0 0.0
    %290 = vmatprep.subr.mxu0 0.0
    %291 = vmatpush2.msra.mxu0 0.0
    %292 = vmatprep.subr.mxu0 0.0
    %293 = vmatpush2.msra.mxu0 0.0
    %294 = vmatprep.subr.mxu0 0.0
    %295 = vmatpush2.msra.mxu0 0.0
    %296 = vmatprep.subr.mxu0 0.0
    %297 = vmatpush2.msra.mxu0 0.0
    %298 = vmatprep.subr.mxu0 0.0
    %299 = vmatpush2.msra.mxu0 0.0
    %300 = vmatprep.subr.mxu0 0.0
    %301 = vmatpush2.msra.mxu0 0.0
    %302 = vmatprep.mubr.f32.mxu0 0.0
    %303 = vmatmul.mubr.f32.gmra.mxu0 %v233
    %v304 = vpop.f32.mrf.mxu0
    %v305 = vadd.f32 %v230, %v304
    %v306 = vpop.f32.mrf.mxu0
    %307 = vmatprep.mubr.f32.mxu0 0.0
    %308 = vmatmul.mubr.f32.gmra.mxu0 %v236
    %v309 = vpop.f32.mrf.mxu0
    %v310 = vadd.f32 %v230, %v309
    %v311 = vpop.f32.mrf.mxu0
    %312 = vdwg.mxu0
    %313 = vst [vmem:[#allocation10] sm:$0xff] %v305
    %314 = vst [vmem:[#allocation10 + $0x8] sm:$0xff] %v310
    // Predicated region
    $region38: #{tpu_custom_call.1} parent=1 // pred_check
      _
    $region39: #{tpu_custom_call.1} parent=1 // pred_check_branch
      %316 = sbr.rel (0) target = $region41
    $region40: #{tpu_custom_call.1} parent=1 // pred_region
      %s318 = ssub.s32 256, 256
      %319 = vsyncadd [#allocation4], %s318
      %s320 = sshll.u32 [#allocation10], 4
      %s321 = int_to_ptr.vmem [resolvable:$true] %s320
      %326 = dma.vmem_to_hbm [thread:$0]  %s321, 256, %s5, [#allocation4], 128, 128, 8
    $region41: #{tpu_custom_call.1} parent=1 // pred_fallthru
      _
    // Predicated region
    $region42: #{tpu_custom_call.1} parent=1 // pred_check
      _
    $region43: #{tpu_custom_call.1} parent=1 // pred_check_branch
      %328 = sbr.rel (0) target = $region45
    $region44: #{tpu_custom_call.1} parent=1 // pred_region
      %329 = dma.done [#allocation4], 256
    $region45: #{tpu_custom_call.1} parent=1 // pred_fallthru
      _
    %330 = vsyncpa [#allocation3], 1
    %331 = vsyncpa [#allocation6], 1
    %332 = vsyncpa [#allocation9], 1
    %333 = vsyncpa [#allocation4], 1

// kernel: tpu_custom_call.1
$region0: #{tpu_custom_call.1}
  #allocation0 [shape = 'u32[]', space=smem, size = 0x4, offset = 0x4, fixed_abs, tag = 'smem constant byte address 0x4 - core index']
  #allocation1 [shape = 'u32[144,128]{1,0:T(1,128)}', space=vmem, size = 0x12000, scoped, tag = 'internal scratch']
  %s0 = inlined_call_operand.hbm [shape: f32[16,32], index: 0, kind: input, shape index: {}]
  %s1 = inlined_call_operand.hbm [shape: f32[32,64], index: 1, kind: input, shape index: {}]
  %s2 = inlined_call_operand.hbm [shape: f32[3,64], index: 2, kind: input, shape index: {}]
  %s3 = inlined_call_operand.hbm [shape: f32[64,128], index: 3, kind: input, shape index: {}]
  %s4 = inlined_call_operand.vmem [shape: f32[1,128], index: 4, kind: input, shape index: {}]
  %s5 = inlined_call_operand.hbm [shape: f32[16,128], index: 5, kind: output, shape index: {}]
  %s6 = sld [smem:[#allocation0]]
  $region46: #{tpu_custom_call.1} parent=0
    _
  %s8 = ssub.s32 1, %s6
  %s9 = scalar_select 0, %s8, %s6
  $region1: #{tpu_custom_call.1} parent=0
    #allocation2 [shape = 'u8[8192]{0}', space=vmem, size = 0x2000, scoped, tag = 'input window, operand 0, single buffered']
    #allocation3 [shape = 's32[1]{0}', space=sflag, size = 0x4, scoped, tag = 'scoped memory for tpu_custom_call.1']
    #allocation4 [shape = 's32[1]{0}', space=sflag, size = 0x4, scoped, tag = 'scoped memory for tpu_custom_call.1']
    #allocation5 [shape = 'u8[16384]{0}', space=vmem, size = 0x4000, scoped, tag = 'input window, operand 1, single buffered']
    #allocation6 [shape = 's32[1]{0}', space=sflag, size = 0x4, scoped, tag = 'scoped memory for tpu_custom_call.1']
    #allocation7 [shape = 'u8[2048]{0}', space=vmem, size = 0x800, scoped, tag = 'input window, operand 2, single buffered']
    #allocation8 [shape = 'u8[32768]{0}', space=vmem, size = 0x8000, scoped, tag = 'input window, operand 3, single buffered']
    #allocation9 [shape = 's32[1]{0}', space=sflag, size = 0x4, scoped, tag = 'scoped memory for tpu_custom_call.1']
    #allocation10 [shape = 'u8[8192]{0}', space=vmem, size = 0x2000, scoped, tag = 'output window, operand 0, single buffered']
    %10 = vsyncpa [#allocation3], 0
    %11 = vsyncpa [#allocation6], 0
    %12 = vsyncpa [#allocation9], 0
    %13 = vsyncpa [#allocation4], 0
    // Predicated region
    $region2: #{tpu_custom_call.1} parent=1 // pred_check
      _
    $region3: #{tpu_custom_call.1} parent=1 // pred_check_branch
      %15 = sbr.rel (0) target = $region5
    $region4: #{tpu_custom_call.1} parent=1 // pred_region
      %s17 = ssub.s32 256, 256
      %18 = vsyncadd [#allocation3], %s17
      %s19 = sshll.u32 [#allocation2], 4
      %s20 = int_to_ptr.vmem [resolvable:$true] %s19
      %25 = dma.hbm_to_vmem [thread:$0]  %s0, 256, %s20, [#allocation3], 128, 128, 8
    $region5: #{tpu_custom_call.1} parent=1 // pred_fallthru
      _
    // Predicated region
    $region6: #{tpu_custom_call.1} parent=1 // pred_check
      _
    $region7: #{tpu_custom_call.1} parent=1 // pred_check_branch
      %27 = sbr.rel (0) target = $region9
    $region8: #{tpu_custom_call.1} parent=1 // pred_region
      %s29 = ssub.s32 512, 512
      %30 = vsyncadd [#allocation6], %s29
      %s31 = sshll.u32 [#allocation5], 4
      %s32 = int_to_ptr.vmem [resolvable:$true] %s31
      %37 = dma.hbm_to_vmem [thread:$0]  %s1, 512, %s32, [#allocation6], 128, 128, 8
    $region9: #{tpu_custom_call.1} parent=1 // pred_fallthru
      _
    // Predicated region
    $region10: #{tpu_custom_call.1} parent=1 // pred_check
      _
    $region11: #{tpu_custom_call.1} parent=1 // pred_check_branch
      %39 = sbr.rel (0) target = $region13
    $region12: #{tpu_custom_call.1} parent=1 // pred_region
      %s41 = ssub.s32 64, 64
      %42 = vsyncadd [#allocation6], %s41
      %s44 = sshll.u32 [#allocation7], 4
      %s45 = int_to_ptr.vmem [resolvable:$true] %s44
      %47 = dma.hbm_to_vmem [thread:$0]  %s2, 64, %s45, [#allocation6]
    $region13: #{tpu_custom_call.1} parent=1 // pred_fallthru
      _
    // Predicated region
    $region14: #{tpu_custom_call.1} parent=1 // pred_check
      _
    $region15: #{tpu_custom_call.1} parent=1 // pred_check_branch
      %49 = sbr.rel (0) target = $region17
    $region16: #{tpu_custom_call.1} parent=1 // pred_region
      %s51 = ssub.s32 1024, 1024
      %52 = vsyncadd [#allocation9], %s51
      %s53 = sshll.u32 [#allocation8], 4
      %s54 = int_to_ptr.vmem [resolvable:$true] %s53
      %59 = dma.hbm_to_vmem [thread:$0]  %s3, 1024, %s54, [#allocation9], 128, 128, 8
    $region17: #{tpu_custom_call.1} parent=1 // pred_fallthru
      _
    // Predicated region
    $region18: #{tpu_custom_call.1} parent=1 // pred_check
      _
    $region19: #{tpu_custom_call.1} parent=1 // pred_check_branch
      %61 = sbr.rel (0) target = $region21
    $region20: #{tpu_custom_call.1} parent=1 // pred_region
      _
    $region21: #{tpu_custom_call.1} parent=1 // pred_fallthru
      _
    // Predicated region
    $region22: #{tpu_custom_call.1} parent=1 // pred_check
      _
    $region23: #{tpu_custom_call.1} parent=1 // pred_check_branch
      %63 = sbr.rel (0) target = $region25
    $region24: #{tpu_custom_call.1} parent=1 // pred_region
      %64 = dma.done [#allocation3], 256
    $region25: #{tpu_custom_call.1} parent=1 // pred_fallthru
      _
    // Predicated region
    $region26: #{tpu_custom_call.1} parent=1 // pred_check
      _
    $region27: #{tpu_custom_call.1} parent=1 // pred_check_branch
      %66 = sbr.rel (0) target = $region29
    $region28: #{tpu_custom_call.1} parent=1 // pred_region
      %67 = dma.done [#allocation6], 512
    $region29: #{tpu_custom_call.1} parent=1 // pred_fallthru
      _
    // Predicated region
    $region30: #{tpu_custom_call.1} parent=1 // pred_check
      _
    $region31: #{tpu_custom_call.1} parent=1 // pred_check_branch
      %69 = sbr.rel (0) target = $region33
    $region32: #{tpu_custom_call.1} parent=1 // pred_region
      %70 = dma.done [#allocation6], 64
    $region33: #{tpu_custom_call.1} parent=1 // pred_fallthru
      _
    // Predicated region
    $region34: #{tpu_custom_call.1} parent=1 // pred_check
      _
    $region35: #{tpu_custom_call.1} parent=1 // pred_check_branch
      %72 = sbr.rel (0) target = $region37
    $region36: #{tpu_custom_call.1} parent=1 // pred_region
      %73 = dma.done [#allocation9], 1024
    $region37: #{tpu_custom_call.1} parent=1 // pred_fallthru
      _
    %v74 = vld [vmem:[#allocation7] sm:$0x7]
    %v75 = vld [vmem:[#allocation2] sm:$0xff]
    %v76 = vld [vmem:[#allocation2 + $0x8] sm:$0xff]
    %v77 = vld [vmem:[#allocation5] sm:$0xff]
    %v78 = vld [vmem:[#allocation5 + $0x8] sm:$0xff]
    %v79 = vld [vmem:[#allocation5 + $0x10] sm:$0xff]
    %v80 = vld [vmem:[#allocation5 + $0x18] sm:$0xff]
    %v81 = vlaneseq
    %v82 = vshrl.u32 %v81, 7
    %v83 = vsub.s32 0, %v82
    %v84 = vrot.slane %v74, %v83
    %vm85 = vcmask 261120
    %v87 = vsel %vm85, %v75, 0
    %v90 = vsel %vm85, %v76, 0
    %92 = vmatprep.subr.mxu0 0.0
    %93 = vmatpush1.msra.mxu0 0.0
    %94 = vmatprep.subr.mxu0 0.0
    %95 = vmatpush1.msra.mxu0 0.0
    %96 = vmatprep.subr.mxu0 0.0
    %97 = vmatpush1.msra.mxu0 0.0
    %98 = vmatprep.subr.mxu0 0.0
    %99 = vmatpush1.msra.mxu0 0.0
    %100 = vmatprep.subr.mxu0 0.0
    %101 = vmatpush1.msra.mxu0 0.0
    %102 = vmatprep.subr.mxu0 0.0
    %103 = vmatpush1.msra.mxu0 0.0
    %104 = vmatprep.subr.mxu0 0.0
    %105 = vmatpush1.msra.mxu0 0.0
    %106 = vmatprep.subr.mxu0 0.0
    %107 = vmatpush1.msra.mxu0 0.0
    %108 = vmatprep.subr.mxu0 0.0
    %109 = vmatpush1.msra.mxu0 0.0
    %110 = vmatprep.subr.mxu0 0.0
    %111 = vmatpush1.msra.mxu0 0.0
    %112 = vmatprep.subr.mxu0 0.0
    %113 = vmatpush1.msra.mxu0 0.0
    %114 = vmatprep.subr.mxu0 0.0
    %115 = vmatpush1.msra.mxu0 0.0
    %116 = vmatprep.subr.mxu0 0.0
    %117 = vmatpush1.msra.mxu0 %v80
    %118 = vmatprep.subr.mxu0 0.0
    %119 = vmatpush1.msra.mxu0 %v79
    %120 = vmatprep.subr.mxu0 0.0
    %121 = vmatpush1.msra.mxu0 %v78
    %122 = vmatprep.subr.mxu0 0.0
    %123 = vmatpush1.msra.mxu0 %v77
    %124 = vmatprep.subr.mxu0 0.0
    %125 = vmatpush2.msra.mxu0 0.0
    %126 = vmatprep.subr.mxu0 0.0
    %127 = vmatpush2.msra.mxu0 0.0
    %128 = vmatprep.subr.mxu0 0.0
    %129 = vmatpush2.msra.mxu0 0.0
    %130 = vmatprep.subr.mxu0 0.0
    %131 = vmatpush2.msra.mxu0 0.0
    %132 = vmatprep.subr.mxu0 0.0
    %133 = vmatpush2.msra.mxu0 0.0
    %134 = vmatprep.subr.mxu0 0.0
    %135 = vmatpush2.msra.mxu0 0.0
    %136 = vmatprep.subr.mxu0 0.0
    %137 = vmatpush2.msra.mxu0 0.0
    %138 = vmatprep.subr.mxu0 0.0
    %139 = vmatpush2.msra.mxu0 0.0
    %140 = vmatprep.subr.mxu0 0.0
    %141 = vmatpush2.msra.mxu0 0.0
    %142 = vmatprep.subr.mxu0 0.0
    %143 = vmatpush2.msra.mxu0 0.0
    %144 = vmatprep.subr.mxu0 0.0
    %145 = vmatpush2.msra.mxu0 0.0
    %146 = vmatprep.subr.mxu0 0.0
    %147 = vmatpush2.msra.mxu0 0.0
    %148 = vmatprep.subr.mxu0 0.0
    %149 = vmatpush2.msra.mxu0 0.0
    %150 = vmatprep.subr.mxu0 0.0
    %151 = vmatpush2.msra.mxu0 0.0
    %152 = vmatprep.subr.mxu0 0.0
    %153 = vmatpush2.msra.mxu0 0.0
    %154 = vmatprep.subr.mxu0 0.0
    %155 = vmatpush2.msra.mxu0 0.0
    %156 = vmatprep.mubr.f32.mxu0 0.0
    %157 = vmatmul.mubr.f32.gmra.mxu0 %v87
    %v158 = vpop.f32.mrf.mxu0
    %v159 = vadd.f32 %v84, %v158
    %v160 = vpop.f32.mrf.mxu0
    %161 = vmatprep.mubr.f32.mxu0 0.0
    %162 = vmatmul.mubr.f32.gmra.mxu0 %v90
    %v163 = vpop.f32.mrf.mxu0
    %v164 = vadd.f32 %v84, %v163
    %v165 = vpop.f32.mrf.mxu0
    %166 = vdwg.mxu0
    %v167 = vmul.f32 %v159, 0.5
    %v168 = vmul.f32 %v164, 0.5
    %v169 = vmul.f32 %v159, 0.70710677
    %v170 = vmul.f32 %v164, 0.70710677
    %v171 = verf.f32.pop %v169
    %v172 = verf.f32.pop %v170
    %v173 = vadd.f32 %v171, 1.0
    %v174 = vadd.f32 %v172, 1.0
    %v175 = vmul.f32 %v167, %v173
    %v176 = vmul.f32 %v168, %v174
    %vm177 = vcmask 523264
    %v178 = vsel %vm177, %v175, 0.0
    %179 = vadd.xlane.f32.xlu0 %v178
    %v180 = vpop.xlane.xlu0 %179
    %v181 = vsel %vm177, %v176, 0.0
    %182 = vadd.xlane.f32.xlu0 %v181
    %v183 = vpop.xlane.xlu0 %182
    %v184 = vrcp.pop 64.0
    %v185 = vmul.f32 %v180, %v184
    %v186 = vmul.f32 %v183, %v184
    %v187 = vsub.f32 %v175, %v185
    %v188 = vsub.f32 %v176, %v186
    %v189 = vmul.f32 %v187, %v187
    %v190 = vmul.f32 %v188, %v188
    %v191 = vsel %vm177, %v189, 0.0
    %192 = vadd.xlane.f32.xlu0 %v191
    %v193 = vpop.xlane.xlu0 %192
    %v194 = vsel %vm177, %v190, 0.0
    %195 = vadd.xlane.f32.xlu0 %v194
    %v196 = vpop.xlane.xlu0 %195
    %v197 = vmul.f32 %v193, %v184
    %v198 = vmul.f32 %v196, %v184
    %v199 = vadd.f32 %v197, 1e-12
    %v200 = vadd.f32 %v198, 1e-12
    %v201 = vrsqrt.pop %v199
    %v202 = vrsqrt.pop %v200
    %v203 = vmul.f32 %v187, %v201
    %v204 = vmul.f32 %v188, %v202
    %v205 = vlaneseq
    %v206 = vshrl.u32 %v205, 7
    %v207 = vsub.s32 1, %v206
    %v208 = vrot.slane %v74, %v207
    %v209 = vmul.f32 %v203, %v208
    %v210 = vmul.f32 %v204, %v208
    %v211 = vlaneseq
    %v212 = vshrl.u32 %v211, 7
    %v213 = vsub.s32 2, %v212
    %v214 = vrot.slane %v74, %v213
    %v215 = vadd.f32 %v209, %v214
    %v216 = vadd.f32 %v210, %v214
    %v217 = vld [vmem:[#allocation8] sm:$0xff]
    %v218 = vld [vmem:[#allocation8 + $0x8] sm:$0xff]
    %v219 = vld [vmem:[#allocation8 + $0x10] sm:$0xff]
    %v220 = vld [vmem:[#allocation8 + $0x18] sm:$0xff]
    %v221 = vld [vmem:[#allocation8 + $0x20] sm:$0xff]
    %v222 = vld [vmem:[#allocation8 + $0x28] sm:$0xff]
    %v223 = vld [vmem:[#allocation8 + $0x30] sm:$0xff]
    %v224 = vld [vmem:[#allocation8 + $0x38] sm:$0xff]
    %v225 = vld [vmem:[%s4] sm:$0x1]
    %v227 = vlaneseq
    %v228 = vshrl.u32 %v227, 7
    %v229 = vsub.s32 0, %v228
    %v230 = vrot.slane %v225, %v229
    %v233 = vsel %vm177, %v215, 0
    %v236 = vsel %vm177, %v216, 0
    %238 = vmatprep.subr.mxu0 0.0
    %239 = vmatpush1.msra.mxu0 0.0
    %240 = vmatprep.subr.mxu0 0.0
    %241 = vmatpush1.msra.mxu0 0.0
    %242 = vmatprep.subr.mxu0 0.0
    %243 = vmatpush1.msra.mxu0 0.0
    %244 = vmatprep.subr.mxu0 0.0
    %245 = vmatpush1.msra.mxu0 0.0
    %246 = vmatprep.subr.mxu0 0.0
    %247 = vmatpush1.msra.mxu0 0.0
    %248 = vmatprep.subr.mxu0 0.0
    %249 = vmatpush1.msra.mxu0 0.0
    %250 = vmatprep.subr.mxu0 0.0
    %251 = vmatpush1.msra.mxu0 0.0
    %252 = vmatprep.subr.mxu0 0.0
    %253 = vmatpush1.msra.mxu0 0.0
    %254 = vmatprep.subr.mxu0 0.0
    %255 = vmatpush1.msra.mxu0 %v224
    %256 = vmatprep.subr.mxu0 0.0
    %257 = vmatpush1.msra.mxu0 %v223
    %258 = vmatprep.subr.mxu0 0.0
    %259 = vmatpush1.msra.mxu0 %v222
    %260 = vmatprep.subr.mxu0 0.0
    %261 = vmatpush1.msra.mxu0 %v221
    %262 = vmatprep.subr.mxu0 0.0
    %263 = vmatpush1.msra.mxu0 %v220
    %264 = vmatprep.subr.mxu0 0.0
    %265 = vmatpush1.msra.mxu0 %v219
    %266 = vmatprep.subr.mxu0 0.0
    %267 = vmatpush1.msra.mxu0 %v218
    %268 = vmatprep.subr.mxu0 0.0
    %269 = vmatpush1.msra.mxu0 %v217
    %270 = vmatprep.subr.mxu0 0.0
    %271 = vmatpush2.msra.mxu0 0.0
    %272 = vmatprep.subr.mxu0 0.0
    %273 = vmatpush2.msra.mxu0 0.0
    %274 = vmatprep.subr.mxu0 0.0
    %275 = vmatpush2.msra.mxu0 0.0
    %276 = vmatprep.subr.mxu0 0.0
    %277 = vmatpush2.msra.mxu0 0.0
    %278 = vmatprep.subr.mxu0 0.0
    %279 = vmatpush2.msra.mxu0 0.0
    %280 = vmatprep.subr.mxu0 0.0
    %281 = vmatpush2.msra.mxu0 0.0
    %282 = vmatprep.subr.mxu0 0.0
    %283 = vmatpush2.msra.mxu0 0.0
    %284 = vmatprep.subr.mxu0 0.0
    %285 = vmatpush2.msra.mxu0 0.0
    %286 = vmatprep.subr.mxu0 0.0
    %287 = vmatpush2.msra.mxu0 0.0
    %288 = vmatprep.subr.mxu0 0.0
    %289 = vmatpush2.msra.mxu0 0.0
    %290 = vmatprep.subr.mxu0 0.0
    %291 = vmatpush2.msra.mxu0 0.0
    %292 = vmatprep.subr.mxu0 0.0
    %293 = vmatpush2.msra.mxu0 0.0
    %294 = vmatprep.subr.mxu0 0.0
    %295 = vmatpush2.msra.mxu0 0.0
    %296 = vmatprep.subr.mxu0 0.0
    %297 = vmatpush2.msra.mxu0 0.0
    %298 = vmatprep.subr.mxu0 0.0
    %299 = vmatpush2.msra.mxu0 0.0
    %300 = vmatprep.subr.mxu0 0.0
    %301 = vmatpush2.msra.mxu0 0.0
    %302 = vmatprep.mubr.f32.mxu0 0.0
    %303 = vmatmul.mubr.f32.gmra.mxu0 %v233
    %v304 = vpop.f32.mrf.mxu0
    %v305 = vadd.f32 %v230, %v304
    %v306 = vpop.f32.mrf.mxu0
    %307 = vmatprep.mubr.f32.mxu0 0.0
    %308 = vmatmul.mubr.f32.gmra.mxu0 %v236
    %v309 = vpop.f32.mrf.mxu0
    %v310 = vadd.f32 %v230, %v309
    %v311 = vpop.f32.mrf.mxu0
    %312 = vdwg.mxu0
    %313 = vst [vmem:[#allocation10] sm:$0xff] %v305
    %314 = vst [vmem:[#allocation10 + $0x8] sm:$0xff] %v310
    // Predicated region
    $region38: #{tpu_custom_call.1} parent=1 // pred_check
      _
    $region39: #{tpu_custom_call.1} parent=1 // pred_check_branch
      %316 = sbr.rel (0) target = $region41
    $region40: #{tpu_custom_call.1} parent=1 // pred_region
      %s318 = ssub.s32 256, 256
      %319 = vsyncadd [#allocation4], %s318
      %s320 = sshll.u32 [#allocation10], 4
      %s321 = int_to_ptr.vmem [resolvable:$true] %s320
      %326 = dma.vmem_to_hbm [thread:$0]  %s321, 256, %s5, [#allocation4], 128, 128, 8
    $region41: #{tpu_custom_call.1} parent=1 // pred_fallthru
      _
    // Predicated region
    $region42: #{tpu_custom_call.1} parent=1 // pred_check
      _
    $region43: #{tpu_custom_call.1} parent=1 // pred_check_branch
      %328 = sbr.rel (0) target = $region45
    $region44: #{tpu_custom_call.1} parent=1 // pred_region
      %329 = dma.done [#allocation4], 256
    $region45: #{tpu_custom_call.1} parent=1 // pred_fallthru
      _
    %330 = vsyncpa [#allocation3], 1
    %331 = vsyncpa [#allocation6], 1
    %332 = vsyncpa [#allocation9], 1
    %333 = vsyncpa [#allocation4], 1

</llo_original>
